<compile_context>
chip_gen: v6e
topology: v6e:2x2x1
jax: 0.10.0
libtpu: 0.0.40
codegen_flags: <defaults>
</compile_context>

<pallas_src>
import jax
import jax.numpy as jnp
from jax import lax
from jax.experimental import pallas as pl
from jax.experimental.pallas import tpu as pltpu

_EPS = 1e-5


# ---------------------------------------------------------------------------
# Pallas kernel: out(Cout, M) = act( W(Cout, K) @ P(K, M) + shift(Cout, 1) )
# ---------------------------------------------------------------------------
def _make_kernel(act):
    def kernel(w_ref, p_ref, s_ref, o_ref):
        acc = jnp.dot(w_ref[...], p_ref[...],
                      preferred_element_type=jnp.float32)      # MXU, f32 acc
        y = acc + s_ref[...]                                    # (Cout,1) lane-broadcast
        if act == "leaky":
            y = jnp.where(y > 0, y, 0.2 * y)
        elif act == "relu":
            y = jnp.maximum(y, 0.0)
        elif act == "sigmoid":
            y = pl.reciprocal(1.0 + jnp.exp(-y), approx=True)   # exp -> EUP
            y = jnp.clip(y, 0.0, 1.0)
        o_ref[...] = y.astype(o_ref.dtype)
    return kernel


def fused_conv_gemm(w, patches, shift, act, out_dtype, mt_max=1024):
    """w: (Cout, K) bf16, patches: (K, M) bf16, shift: (Cout, 1) f32."""
    co, k = w.shape
    k2, m = patches.shape
    assert k == k2
    # Lane-pad only the tiny bottleneck layers (M < 128); big layers stay exact.
    mp = max(m, 128)
    if mp != m:
        patches = jnp.pad(patches, ((0, 0), (0, mp - m)))
    mt = mt_max if mp % mt_max == 0 else mp        # >=1024-lane tiles, 1 step for most layers

    out = pl.pallas_call(
        _make_kernel(act),
        out_shape=jax.ShapeDtypeStruct((co, mp), out_dtype),
        grid=(mp // mt,),
        in_specs=[
            pl.BlockSpec((co, k), lambda j: (0, 0)),   # weight stays resident
            pl.BlockSpec((k, mt), lambda j: (0, j)),
            pl.BlockSpec((co, 1), lambda j: (0, 0)),
        ],
        out_specs=pl.BlockSpec((co, mt), lambda j: (0, j)),
        compiler_params=pltpu.CompilerParams(
            dimension_semantics=("parallel",)),
    )(w, patches, shift)
    return out[:, :m] if mp != m else out


# ---------------------------------------------------------------------------
# Patch construction (pure XLA data movement on small bf16 activations)
# ---------------------------------------------------------------------------
def _im2col_down(x):
    """Conv2d k=4 s=2 p=1 patches: (N,C,H,W) -> (C*16, N*Ho*Wo)."""
    n, c, h, w = x.shape
    ho, wo = h // 2, w // 2
    xp = jnp.pad(x, ((0, 0), (0, 0), (1, 1), (1, 1)))
    wins = [xp[:, :, ki:ki + 2 * ho:2, kj:kj + 2 * wo:2]
            for ki in range(4) for kj in range(4)]          # each (N,C,Ho,Wo)
    p = jnp.stack(wins, axis=2)                             # (N,C,16,Ho,Wo)
    p = p.transpose(1, 2, 0, 3, 4)                          # (C,16,N,Ho,Wo)
    return p.reshape(c * 16, n * ho * wo), (n, ho, wo)


def _im2col_up(x):
    """3x3 shifted-window patches for polyphase ConvT: (N,C,H,W) -> (C*9, N*H*W)."""
    n, c, h, w = x.shape
    xp = jnp.pad(x, ((0, 0), (0, 0), (1, 1), (1, 1)))
    wins = [xp[:, :, u:u + h, v:v + w] for u in range(3) for v in range(3)]
    p = jnp.stack(wins, axis=2)                             # (N,C,9,H,W)
    p = p.transpose(1, 2, 0, 3, 4)                          # (C,9,N,H,W)
    return p.reshape(c * 9, n * h * w), (n, h, w)


# ---------------------------------------------------------------------------
# Layers
# ---------------------------------------------------------------------------
def down_layer(x, fp):
    """Conv2d(4,2,1) + BatchNorm(eval, folded) + LeakyReLU(0.2)."""
    patches, (n, ho, wo) = _im2col_down(x)
    cout = fp["w"].shape[0]
    y = fused_conv_gemm(fp["w"], patches, fp["shift"], "leaky", jnp.bfloat16)
    return y.reshape(cout, n, ho, wo).transpose(1, 0, 2, 3)


def up_layer(x, fp, act, out_dtype):
    """ConvTranspose2d(4,2,1) (+BN) + ReLU / Sigmoid via polyphase GEMM."""
    patches, (n, h, w) = _im2col_up(x)
    cout = fp["w"].shape[0] // 4
    y = fused_conv_gemm(fp["w"], patches, fp["shift"], act, out_dtype)
    y = y.reshape(2, 2, cout, n, h, w)                      # (ph,pw,o,n,h,w)
    y = y.transpose(3, 2, 4, 0, 5, 1)                       # (n,o,h,ph,w,pw)
    return y.reshape(n, cout, 2 * h, 2 * w)


# ---------------------------------------------------------------------------
# Host-side parameter preparation (fold BN scale into weights, bf16 cast)
# ---------------------------------------------------------------------------
def _fold_bn(p):
    s = p["gamma"] / jnp.sqrt(p["rv"] + _EPS)
    shift = p["beta"] + (p["b"] - p["rm"]) * s
    return s, shift


def _build_up_weight(wt, scale):
    """ConvT weight (Cin,Cout,4,4) -> polyphase matrix (4*Cout, Cin*9).

    Output parity (ph,pw) at (ho,wo) = sum over sub-taps (sh,sw) in {0,1}^2 of
    Wt[:, :, 3-2*sh-ph, 3-2*sw-pw] applied to the shifted window (ph+sh, pw+sw)
    of the 1-zero-padded input (exact ConvTranspose2d(4,2,1) identity).
    """
    cin, cout = wt.shape[0], wt.shape[1]
    w9 = jnp.zeros((2, 2, cout, cin, 3, 3), jnp.float32)
    for ph in range(2):
        for pw in range(2):
            for sh in range(2):
                for sw in range(2):
                    ki = 3 - 2 * sh - ph
                    kj = 3 - 2 * sw - pw
                    w9 = w9.at[ph, pw, :, :, ph + sh, pw + sw].set(
                        wt[:, :, ki, kj].T)
    w9 = w9 * scale[None, None, :, None, None, None]
    return w9.reshape(4 * cout, cin * 9)


def fold_params(params):
    downs = []
    for p in params["down"]:
        cout = p["w"].shape[0]
        s, shift = _fold_bn(p)
        downs.append(dict(
            w=(p["w"].reshape(cout, -1) * s[:, None]).astype(jnp.bfloat16),
            shift=shift.reshape(cout, 1).astype(jnp.float32)))
    ups = []
    for i, p in enumerate(params["up"]):
        cout = p["w"].shape[1]
        if i == len(params["up"]) - 1:              # outermost: no BN
            s = jnp.ones((cout,), jnp.float32)
            shift = p["b"]
        else:
            s, shift = _fold_bn(p)
        ups.append(dict(
            w=_build_up_weight(p["w"], s).astype(jnp.bfloat16),
            shift=jnp.tile(shift, 4).reshape(4 * cout, 1).astype(jnp.float32)))
    return dict(down=downs, up=ups)


# ---------------------------------------------------------------------------
# Parameter init (deterministic, synthetic; PyTorch layouts)
# ---------------------------------------------------------------------------
def init_params(key, ngf=8, nc=1):
    def bn(key, c):
        k1, k2, k3, k4 = jax.random.split(key, 4)
        return dict(
            gamma=1.0 + 0.05 * jax.random.normal(k1, (c,), jnp.float32),
            beta=0.05 * jax.random.normal(k2, (c,), jnp.float32),
            rm=0.05 * jax.random.normal(k3, (c,), jnp.float32),
            rv=0.9 + 0.1 * jnp.abs(jax.random.normal(k4, (c,), jnp.float32)),
        )

    down_ch = [(nc, ngf), (ngf, ngf * 2), (ngf * 2, ngf * 4), (ngf * 4, ngf * 8),
               (ngf * 8, ngf * 8), (ngf * 8, ngf * 8), (ngf * 8, ngf * 8)]
    up_ch = [(ngf * 8, ngf * 8), (ngf * 16, ngf * 8), (ngf * 16, ngf * 8),
             (ngf * 16, ngf * 4), (ngf * 8, ngf * 2), (ngf * 4, ngf), (ngf * 2, nc)]

    downs, ups = [], []
    for cin, cout in down_ch:
        key, kw, kb, kbn = jax.random.split(key, 4)
        downs.append(dict(
            w=0.05 * jax.random.normal(kw, (cout, cin, 4, 4), jnp.float32),
            b=0.05 * jax.random.normal(kb, (cout,), jnp.float32),
            **bn(kbn, cout)))
    for cin, cout in up_ch:
        key, kw, kb, kbn = jax.random.split(key, 4)
        ups.append(dict(
            w=0.05 * jax.random.normal(kw, (cin, cout, 4, 4), jnp.float32),  # ConvT layout
            b=0.05 * jax.random.normal(kb, (cout,), jnp.float32),
            **bn(kbn, cout)))
    return dict(down=downs, up=ups)


# ---------------------------------------------------------------------------
# Full forward pass (mirrors UnetModel.forward)
# ---------------------------------------------------------------------------
def unet_forward(x, fp):
    h = x.astype(jnp.bfloat16)
    skips = []
    for p in fp["down"]:
        h = down_layer(h, p)
        skips.append(h)                                     # conv1..conv7

    h = up_layer(skips[6], fp["up"][0], "relu", jnp.bfloat16)
    for i, s in enumerate([skips[5], skips[4], skips[3], skips[2], skips[1]]):
        h = up_layer(jnp.concatenate([h, s], axis=1), fp["up"][i + 1],
                     "relu", jnp.bfloat16)
    return up_layer(jnp.concatenate([h, skips[0]], axis=1), fp["up"][6],
                    "sigmoid", jnp.float32)


# ---------------------------------------------------------------------------
# Pure-JAX f32 references (single-layer unit checks)
# ---------------------------------------------------------------------------
def _ref_down_layer(x, p):
    y = lax.conv_general_dilated(
        x.astype(jnp.float32), p["w"], window_strides=(2, 2),
        padding=((1, 1), (1, 1)), dimension_numbers=("NCHW", "OIHW", "NCHW"))
    y = y + p["b"].reshape(1, -1, 1, 1)
    s = p["gamma"] / jnp.sqrt(p["rv"] + _EPS)
    y = (y - p["rm"].reshape(1, -1, 1, 1)) * s.reshape(1, -1, 1, 1) \
        + p["beta"].reshape(1, -1, 1, 1)
    return jnp.where(y > 0, y, 0.2 * y)


def _ref_up_outermost(x, p):
    # ConvTranspose2d(4,2,1) == conv(dilate(x,2), flip(W).swap(O,I), pad=2)
    w_eq = jnp.flip(p["w"], axis=(2, 3)).transpose(1, 0, 2, 3)   # (Cout,Cin,4,4)
    y = lax.conv_general_dilated(
        x.astype(jnp.float32), w_eq, window_strides=(1, 1),
        padding=((2, 2), (2, 2)), lhs_dilation=(2, 2),
        dimension_numbers=("NCHW", "OIHW", "NCHW"))
    return jax.nn.sigmoid(y + p["b"].reshape(1, -1, 1, 1))


if __name__ == "__main__":
    key = jax.random.PRNGKey(0)
    kx, kp, kt = jax.random.split(key, 3)

    ngf, nc = 8, 1
    # 7 stride-2 downsamples -> spatial size must be a multiple of 128.
    x = jax.random.normal(kx, (1, nc, 128, 128), jnp.float32)
    params = init_params(kp, ngf=ngf, nc=nc)
    prepared = fold_params(params)

    # --- single-layer checks against pure-JAX f32 references (loose, bf16) ---
    got = down_layer(x.astype(jnp.bfloat16), prepared["down"][0]).astype(jnp.float32)
    ref = _ref_down_layer(x, params["down"][0])
    tol = 0.03 * max(1.0, float(jnp.max(jnp.abs(ref))))
    assert float(jnp.max(jnp.abs(got - ref))) < tol

    t = jax.random.normal(kt, (1, 2 * ngf, 64, 64), jnp.float32)
    got = up_layer(t.astype(jnp.bfloat16), prepared["up"][6], "sigmoid", jnp.float32)
    ref = _ref_up_outermost(t, params["up"][6])
    assert float(jnp.max(jnp.abs(got - ref))) < 0.03

    # --- full forward ---------------------------------------------------------
    fwd = jax.jit(unet_forward)
    out = jax.block_until_ready(fwd(x, prepared))

    assert out.shape == (1, nc, 128, 128), out.shape
    assert bool(jnp.all(jnp.isfinite(out)))
    assert bool(jnp.all((out >= 0.0) & (out <= 1.0)))  # sigmoid output range
    print("KERNEL_OK")
</pallas_src>

<mosaic_0001>
module attributes {stable_mosaic.version = 11 : i64} {
  func.func @kernel(%arg0: i32, %arg1: memref<8x16xbf16, #tpu.memory_space<vmem>>, %arg2: memref<16x1024xbf16, #tpu.memory_space<vmem>>, %arg3: memref<8x1xf32, #tpu.memory_space<vmem>>, %arg4: memref<8x1024xbf16, #tpu.memory_space<vmem>>) attributes {dimension_semantics = [#tpu.dimension_semantics<parallel>], iteration_bounds = array<i64: 4>, scalar_prefetch = 0 : i64, scratch_operands = 0 : i64, tpu.core_type = #tpu.core_type<tc>, window_params = [{pipeline_mode = #tpu.pipeline_mode<synchronous>, transform_indices = @transform_0, window_bounds = array<i64: 8, 16>}, {transform_indices = @transform_1, window_bounds = array<i64: 16, 1024>}, {pipeline_mode = #tpu.pipeline_mode<synchronous>, transform_indices = @transform_2, window_bounds = array<i64: 8, 1>}, {transform_indices = @transform_3, window_bounds = array<i64: 8, 1024>}]} {
    %c0 = arith.constant 0 : index
    %c0_0 = arith.constant 0 : index
    %0 = vector.load %arg1[%c0, %c0_0] : memref<8x16xbf16, #tpu.memory_space<vmem>>, vector<8x16xbf16>
    %c0_1 = arith.constant 0 : index
    %c0_2 = arith.constant 0 : index
    %1 = vector.load %arg2[%c0_1, %c0_2] : memref<16x1024xbf16, #tpu.memory_space<vmem>>, vector<16x1024xbf16>
    %cst = arith.constant dense<0.000000e+00> : vector<8x1024xf32>
    %2 = tpu.matmul %0, %1, %cst {dimension_numbers = #tpu.dot_dimension_numbers<[1], [0], [0], [1], [0, 0, 1, 1], [], []>} : vector<8x16xbf16>, vector<16x1024xbf16>, vector<8x1024xf32> -> vector<8x1024xf32>
    %c0_3 = arith.constant 0 : index
    %c0_4 = arith.constant 0 : index
    %3 = vector.load %arg3[%c0_3, %c0_4] : memref<8x1xf32, #tpu.memory_space<vmem>>, vector<8x1xf32>
    %4 = vector.broadcast %3 : vector<8x1xf32> to vector<8x1024xf32>
    %5 = arith.addf %2, %4 : vector<8x1024xf32>
    %cst_5 = arith.constant 0.000000e+00 : f32
    %6 = vector.broadcast %cst_5 : f32 to vector<8x1024xf32>
    %7 = arith.cmpf ogt, %5, %6 : vector<8x1024xf32>
    %cst_6 = arith.constant 2.000000e-01 : f32
    %8 = vector.broadcast %cst_6 : f32 to vector<8x1024xf32>
    %9 = arith.mulf %8, %5 : vector<8x1024xf32>
    %10 = arith.select %7, %5, %9 : vector<8x1024xi1>, vector<8x1024xf32>
    %11 = arith.truncf %10 : vector<8x1024xf32> to vector<8x1024xbf16>
    %c0_7 = arith.constant 0 : index
    %c0_8 = arith.constant 0 : index
    %12 = vector.load %arg4[%c0_7, %c0_8] : memref<8x1024xbf16, #tpu.memory_space<vmem>>, vector<8x1024xbf16>
    tpu.vector_store %arg4[%c0_7, %c0_8], %11 {strides = array<i32>} : memref<8x1024xbf16, #tpu.memory_space<vmem>>, vector<8x1024xbf16>,
    return
  }
  func.func @transform_0(%arg0: i32) -> (i32, i32) {
    %c0_i32 = arith.constant 0 : i32
    %c0_i32_0 = arith.constant 0 : i32
    %c0_i32_1 = arith.constant 0 : i32
    return %c0_i32, %c0_i32_0 : i32, i32
  }
  func.func @transform_1(%arg0: i32) -> (i32, i32) {
    %c0_i32 = arith.constant 0 : i32
    %c0_i32_0 = arith.constant 0 : i32
    return %c0_i32, %arg0 : i32, i32
  }
  func.func @transform_2(%arg0: i32) -> (i32, i32) {
    %c0_i32 = arith.constant 0 : i32
    %c0_i32_0 = arith.constant 0 : i32
    %c0_i32_1 = arith.constant 0 : i32
    return %c0_i32, %c0_i32_0 : i32, i32
  }
  func.func @transform_3(%arg0: i32) -> (i32, i32) {
    %c0_i32 = arith.constant 0 : i32
    %c0_i32_0 = arith.constant 0 : i32
    return %c0_i32, %arg0 : i32, i32
  }
}

</mosaic_0001>

<llo_original>
// kernel: tpu_custom_call.1
$region0: #{tpu_custom_call.1}
  #allocation0 [shape = 'u32[]', space=smem, size = 0x4, offset = 0x4, fixed_abs, tag = 'smem constant byte address 0x4 - core index']
  #allocation1 [shape = 'u32[144,128]{1,0:T(1,128)}', space=vmem, size = 0x12000, scoped, tag = 'internal scratch']
  %s0 = inlined_call_operand.vmem [shape: bf16[8,16], index: 0, kind: input, shape index: {}]
  %s1 = inlined_call_operand.hbm [shape: bf16[16,4096], index: 1, kind: input, shape index: {}]
  %s2 = inlined_call_operand.vmem [shape: f32[8,1], index: 2, kind: input, shape index: {}]
  %s3 = inlined_call_operand.hbm [shape: bf16[8,4096], index: 3, kind: output, shape index: {}]
  %s4 = sld [smem:[#allocation0]]
  $region49: #{tpu_custom_call.1} parent=0
    _
  %s6 = ssub.s32 1, %s4
  %s7 = scalar_select 0, %s6, %s4
  $region1: #{tpu_custom_call.1} parent=0
    #allocation2 [shape = 'u8[65536]{0}', space=vmem, size = 0x10000, scoped, tag = 'input window, operand 1']
    #allocation3 [shape = 's32[2]{0}', space=sflag, size = 0x8, scoped, tag = 'scoped memory for tpu_custom_call.1']
    #allocation4 [shape = 's32[2]{0}', space=sflag, size = 0x8, scoped, tag = 'scoped memory for tpu_custom_call.1']
    #allocation5 [shape = 'u8[32768]{0}', space=vmem, size = 0x8000, scoped, tag = 'output window, operand 0']
    %8 = vsyncpa [#allocation3], 0
    %s9 = scalar_lea.sflag [#allocation3], 1
    %10 = vsyncpa %s9, 0
    %11 = vsyncpa [#allocation4], 0
    %s12 = scalar_lea.sflag [#allocation4], 1
    %13 = vsyncpa %s12, 0
    loop: start=0, step=1, limit=6
    $region2: #{tpu_custom_call.1} parent=1 // loop_pre_header
      _
    $region3: #{tpu_custom_call.1} parent=1 // loop_header
      %s15 = sphi 0, %s19
      %p16 = scmp.ge.s32.totalorder %s15, 6
      %s23 = sphi 0, %s23
      %s25 = sphi 0, %s23
      %s26 = sphi 0, %s25
      %s40 = sphi 0, %s26
      %s46 = sphi 0, %s48
      %s49 = sphi 0, %s46
      %s50 = sphi 0, %s49
      %s66 = sphi 0, %s50
      %s70 = sphi 0, %s70
      %s72 = sphi 0, %s70
      %s73 = sphi 0, %s72
      %s87 = sphi 0, %s73
      %s93 = sphi 0, %s95
      %s96 = sphi 0, %s93
      %s97 = sphi 0, %s96
      %s113 = sphi 0, %s97
    $region4: #{tpu_custom_call.1} parent=1 // loop_header_branch
      %18 = sbr.rel (%p16) target = $region8
    $region5: #{tpu_custom_call.1} parent=1 // loop_body
      %s20 = ssub.s32 %s15, 1
      %s21 = ssub.s32 %s15, 2
      %s22 = sadd.s32 %s15, 1
      %s24 = sadd.s32 %s23, 1
      %p27 = scmp.eq.s32.totalorder %s15, 3
      %p28 = scmp.ne.s32.totalorder %s23, %s25
      %p29 = scmp.eq.s32.totalorder %s15, 0
      %p30 = por %p28, %p29
      %p31 = scmp.ne.s32.totalorder %s23, %s25
      %p32 = scmp.eq.s32.totalorder %s20, 3
      %p33 = por %p31, %p32
      %p34 = scmp.ne.s32.totalorder %s25, %s26
      %p35 = scmp.eq.s32.totalorder %s20, 0
      %p36 = por %p34, %p35
      %p37 = scmp.ne.s32.totalorder %s25, %s26
      %p38 = scmp.eq.s32.totalorder %s21, 3
      %p39 = por %p37, %p38
      %p41 = scmp.ne.s32.totalorder %s26, %s40
      %p42 = scmp.eq.s32.totalorder %s21, 0
      %p43 = por %p41, %p42
      %s44 = ssub.s32 %s15, %s22
      %p45 = scmp.eq.s32.totalorder %s44, 0
      %s47 = sadd.s32 %s46, 1
      %s48 = scalar_select %p45, %s46, %s47
      %p51 = pneg %p45
      %p52 = scmp.eq.s32.totalorder %s15, 3
      %p53 = por %p51, %p52
      %p54 = scmp.ne.s32.totalorder %s46, %s49
      %p55 = scmp.eq.s32.totalorder %s15, 0
      %p56 = por %p54, %p55
      %p57 = scmp.ne.s32.totalorder %s46, %s49
      %p58 = scmp.eq.s32.totalorder %s20, 3
      %p59 = por %p57, %p58
      %p60 = scmp.ne.s32.totalorder %s49, %s50
      %p61 = scmp.eq.s32.totalorder %s20, 0
      %p62 = por %p60, %p61
      %p63 = scmp.ne.s32.totalorder %s49, %s50
      %p64 = scmp.eq.s32.totalorder %s21, 3
      %p65 = por %p63, %p64
      %p67 = scmp.ne.s32.totalorder %s50, %s66
      %p68 = scmp.eq.s32.totalorder %s21, 0
      %p69 = por %p67, %p68
      %s71 = sadd.s32 %s70, 1
      %p74 = scmp.eq.s32.totalorder %s15, 3
      %p75 = scmp.ne.s32.totalorder %s70, %s72
      %p76 = scmp.eq.s32.totalorder %s15, 0
      %p77 = por %p75, %p76
      %p78 = scmp.ne.s32.totalorder %s70, %s72
      %p79 = scmp.eq.s32.totalorder %s20, 3
      %p80 = por %p78, %p79
      %p81 = scmp.ne.s32.totalorder %s72, %s73
      %p82 = scmp.eq.s32.totalorder %s20, 0
      %p83 = por %p81, %p82
      %p84 = scmp.ne.s32.totalorder %s72, %s73
      %p85 = scmp.eq.s32.totalorder %s21, 3
      %p86 = por %p84, %p85
      %p88 = scmp.ne.s32.totalorder %s73, %s87
      %p89 = scmp.eq.s32.totalorder %s21, 0
      %p90 = por %p88, %p89
      %s91 = ssub.s32 %s15, %s22
      %p92 = scmp.eq.s32.totalorder %s91, 0
      %s94 = sadd.s32 %s93, 1
      %s95 = scalar_select %p92, %s93, %s94
      %p98 = pneg %p92
      %p99 = scmp.eq.s32.totalorder %s15, 3
      %p100 = por %p98, %p99
      %p101 = scmp.ne.s32.totalorder %s93, %s96
      %p102 = scmp.eq.s32.totalorder %s15, 0
      %p103 = por %p101, %p102
      %p104 = scmp.ne.s32.totalorder %s93, %s96
      %p105 = scmp.eq.s32.totalorder %s20, 3
      %p106 = por %p104, %p105
      %p107 = scmp.ne.s32.totalorder %s96, %s97
      %p108 = scmp.eq.s32.totalorder %s20, 0
      %p109 = por %p107, %p108
      %p110 = scmp.ne.s32.totalorder %s96, %s97
      %p111 = scmp.eq.s32.totalorder %s21, 3
      %p112 = por %p110, %p111
      %p114 = scmp.ne.s32.totalorder %s97, %s113
      %p115 = scmp.eq.s32.totalorder %s21, 0
      %p116 = por %p114, %p115
      %p117 = scmp.le.s32.totalorder 1, %s15
      %p118 = scmp.lt.s32.totalorder %s15, 5
      %p119 = pnand %p117, %p118
      %p120 = pneg %p119
      // Predicated region
      $region9: #{tpu_custom_call.1} parent=5 // pred_check
        _
      $region10: #{tpu_custom_call.1} parent=5 // pred_check_branch
        %122 = sbr.rel (%p119) target = $region12
      $region11: #{tpu_custom_call.1} parent=5 // pred_region
        %s123 = ssub.s32 %s15, 1
        // Predicated region
        $region13: #{tpu_custom_call.1} parent=11 // pred_check
          %p124 = pneg %p36
        $region14: #{tpu_custom_call.1} parent=11 // pred_check_branch
          %126 = sbr.rel (%p124) target = $region16
        $region15: #{tpu_custom_call.1} parent=11 // pred_region
          _
        $region16: #{tpu_custom_call.1} parent=11 // pred_fallthru
          _
        // Predicated region
        $region17: #{tpu_custom_call.1} parent=11 // pred_check
          %p127 = pneg %p83
        $region18: #{tpu_custom_call.1} parent=11 // pred_check_branch
          %129 = sbr.rel (%p127) target = $region20
        $region19: #{tpu_custom_call.1} parent=11 // pred_region
          _
        $region20: #{tpu_custom_call.1} parent=11 // pred_fallthru
          _
      $region12: #{tpu_custom_call.1} parent=5 // pred_fallthru
        _
      %p130 = scmp.lt.s32.totalorder %s15, 4
      // Predicated region
      $region21: #{tpu_custom_call.1} parent=5 // pred_check
        %p131 = pneg %p130
      $region22: #{tpu_custom_call.1} parent=5 // pred_check_branch
        %133 = sbr.rel (%p131) target = $region24
      $region23: #{tpu_custom_call.1} parent=5 // pred_region
        // Predicated region
        $region25: #{tpu_custom_call.1} parent=23 // pred_check
          %p134 = pneg %p56
        $region26: #{tpu_custom_call.1} parent=23 // pred_check_branch
          %136 = sbr.rel (%p134) target = $region28
        $region27: #{tpu_custom_call.1} parent=23 // pred_region
          %s137 = sand.u32 %s46, 1
          %s138 = scalar_lea.sflag [#allocation3], %s137
          %s139 = sand.u32 %s46, 1
          %s140 = smul.addr %s139, 64
          %s141 = scalar_lea.vmem [#allocation2], %s140
          %s142 = smul.u32 8, %s15
          %s144 = ssub.s32 1024, 1024
          %145 = vsyncadd %s138, %s144
          %s146 = smul.addr %s142, 64
          %s147 = scalar_lea.hbm %s1, %s146
          %s148 = sshll.u32 %s141, 4
          %s149 = int_to_ptr.vmem [resolvable:$true] %s148
          %154 = dma.hbm_to_vmem [thread:$0]  %s147, 1024, %s149, %s138, 2048, 512, 32
        $region28: #{tpu_custom_call.1} parent=23 // pred_fallthru
          _
      $region24: #{tpu_custom_call.1} parent=5 // pred_fallthru
        _
      %p155 = scmp.le.s32.totalorder 1, %s15
      %p156 = scmp.lt.s32.totalorder %s15, 5
      %p157 = pnand %p155, %p156
      %p158 = pneg %p157
      // Predicated region
      $region29: #{tpu_custom_call.1} parent=5 // pred_check
        _
      $region30: #{tpu_custom_call.1} parent=5 // pred_check_branch
        %160 = sbr.rel (%p157) target = $region32
      $region31: #{tpu_custom_call.1} parent=5 // pred_region
        %s161 = ssub.s32 %s15, 1
        %s162 = sand.u32 %s49, 1
        %s163 = scalar_lea.sflag [#allocation3], %s162
        %s164 = sand.u32 %s49, 1
        %s165 = smul.addr %s164, 64
        %s166 = scalar_lea.vmem [#allocation2], %s165
        // Predicated region
        $region33: #{tpu_custom_call.1} parent=31 // pred_check
          %p167 = pneg %p62
        $region34: #{tpu_custom_call.1} parent=31 // pred_check_branch
          %169 = sbr.rel (%p167) target = $region36
        $region35: #{tpu_custom_call.1} parent=31 // pred_region
          %170 = dma.done %s163, 1024
        $region36: #{tpu_custom_call.1} parent=31 // pred_fallthru
          _
        %p171 = pneg %p36
        %p172 = pneg %p33
        %s173 = sand.u32 %s49, 1
        %s174 = scalar_lea.sflag [#allocation3], %s173
        %s175 = sand.u32 %s49, 1
        %s176 = smul.addr %s175, 64
        %s177 = scalar_lea.vmem [#allocation2], %s176
        %p178 = pneg %p62
        %p179 = pneg %p59
        %p180 = pneg %p83
        %p181 = pneg %p80
        %p182 = pneg %p109
        %p183 = pneg %p106
        %s184 = sand.u32 %s96, 1
        %s185 = scalar_lea.sflag [#allocation4], %s184
        %s186 = sand.u32 %s96, 1
        %s187 = smul.addr %s186, 32
        %s188 = scalar_lea.vmem [#allocation5], %s187
        %s189 = smul.u32 8, %s20
        %s190 = smul.u32 8, %s20
        %v192 = vld [vmem:[%s0] sm:$0xf]
        %v193 = vld [vmem:[%s166] sm:$0xff]
        %v194 = vld [vmem:[%s166 + $0x8] sm:$0xff]
        %v195 = vld [vmem:[%s166 + $0x10] sm:$0xff]
        %v196 = vld [vmem:[%s166 + $0x18] sm:$0xff]
        %v197 = vld [vmem:[%s166 + $0x20] sm:$0xff]
        %v198 = vld [vmem:[%s166 + $0x28] sm:$0xff]
        %v199 = vld [vmem:[%s166 + $0x30] sm:$0xff]
        %v200 = vld [vmem:[%s166 + $0x38] sm:$0xff]
        %v201 = vld [vmem:[%s2] sm:$0xff]
        %203 = vset.pattern.permute.xlu0 0
        %204 = vperm.xlu0 %203, %v201
        %v205 = vpop.permute.xlu0 %204
        %v215 = vunpack.c.l.b16 %v193
        %v216 = vunpack.c.h.b16 %v193
        %v217 = vunpack.c.l.b16 %v194
        %v218 = vunpack.c.h.b16 %v194
        %v219 = vunpack.c.l.b16 %v195
        %v220 = vunpack.c.h.b16 %v195
        %v221 = vunpack.c.l.b16 %v196
        %v222 = vunpack.c.h.b16 %v196
        %v223 = vunpack.c.l.b16 %v197
        %v224 = vunpack.c.h.b16 %v197
        %v225 = vunpack.c.l.b16 %v198
        %v226 = vunpack.c.h.b16 %v198
        %v227 = vunpack.c.l.b16 %v199
        %v228 = vunpack.c.h.b16 %v199
        %v229 = vunpack.c.l.b16 %v200
        %v230 = vunpack.c.h.b16 %v200
        %v231 = vpack.c.b16 %v223, %v215
        %v232 = vpack.c.b16 %v224, %v216
        %v233 = vpack.c.b16 %v225, %v217
        %v234 = vpack.c.b16 %v226, %v218
        %v235 = vpack.c.b16 %v227, %v219
        %v236 = vpack.c.b16 %v228, %v220
        %v237 = vpack.c.b16 %v229, %v221
        %v238 = vpack.c.b16 %v230, %v222
        %vm247 = vcmask 130048
        %v249 = vsel %vm247, %v192, 0
        %251 = vmatprep.subr.bf16.mxu0 0
        %252 = vmatpush1.bf16.msra.mxu0 0
        %253 = vmatprep.subr.bf16.mxu0 0
        %254 = vmatpush1.bf16.msra.mxu0 0
        %255 = vmatprep.subr.bf16.mxu0 0
        %256 = vmatpush1.bf16.msra.mxu0 0
        %257 = vmatprep.subr.bf16.mxu0 0
        %258 = vmatpush1.bf16.msra.mxu0 0
        %259 = vmatprep.subr.bf16.mxu0 0
        %260 = vmatpush1.bf16.msra.mxu0 0
        %261 = vmatprep.subr.bf16.mxu0 0
        %262 = vmatpush1.bf16.msra.mxu0 0
        %263 = vmatprep.subr.bf16.mxu0 0
        %264 = vmatpush1.bf16.msra.mxu0 0
        %265 = vmatprep.subr.bf16.mxu0 %v232
        %266 = vmatpush1.bf16.msra.mxu0 %v231
        %267 = vmatprep.subr.bf16.mxu0 0
        %268 = vmatpush2.bf16.msra.mxu0 0
        %269 = vmatprep.subr.bf16.mxu0 0
        %270 = vmatpush2.bf16.msra.mxu0 0
        %271 = vmatprep.subr.bf16.mxu0 0
        %272 = vmatpush2.bf16.msra.mxu0 0
        %273 = vmatprep.subr.bf16.mxu0 0
        %274 = vmatpush2.bf16.msra.mxu0 0
        %275 = vmatprep.subr.bf16.mxu0 0
        %276 = vmatpush2.bf16.msra.mxu0 0
        %277 = vmatprep.subr.bf16.mxu0 0
        %278 = vmatpush2.bf16.msra.mxu0 0
        %279 = vmatprep.subr.bf16.mxu0 0
        %280 = vmatpush2.bf16.msra.mxu0 0
        %281 = vmatprep.subr.bf16.mxu0 0
        %282 = vmatpush2.bf16.msra.mxu0 0
        %283 = vmatprep.mubr.bf16.mxu0 0
        %284 = vmatmul.mubr.bf16.gmra.mxu0 %v249
        %v285 = vpop.f32.mrf.mxu0
        %v286 = vadd.f32 %v205, %v285
        %v287 = vpop.f32.mrf.mxu0
        %v288 = vadd.f32 %v205, %v287
        %v289 = vpop.f32.mrf.mxu0
        %v290 = vpop.f32.mrf.mxu0
        %291 = vdwg.mxu0
        %292 = vmatprep.subr.bf16.mxu0 0
        %293 = vmatpush1.bf16.msra.mxu0 0
        %294 = vmatprep.subr.bf16.mxu0 0
        %295 = vmatpush1.bf16.msra.mxu0 0
        %296 = vmatprep.subr.bf16.mxu0 0
        %297 = vmatpush1.bf16.msra.mxu0 0
        %298 = vmatprep.subr.bf16.mxu0 0
        %299 = vmatpush1.bf16.msra.mxu0 0
        %300 = vmatprep.subr.bf16.mxu0 0
        %301 = vmatpush1.bf16.msra.mxu0 0
        %302 = vmatprep.subr.bf16.mxu0 0
        %303 = vmatpush1.bf16.msra.mxu0 0
        %304 = vmatprep.subr.bf16.mxu0 0
        %305 = vmatpush1.bf16.msra.mxu0 0
        %306 = vmatprep.subr.bf16.mxu0 %v234
        %307 = vmatpush1.bf16.msra.mxu0 %v233
        %308 = vmatprep.subr.bf16.mxu0 0
        %309 = vmatpush2.bf16.msra.mxu0 0
        %310 = vmatprep.subr.bf16.mxu0 0
        %311 = vmatpush2.bf16.msra.mxu0 0
        %312 = vmatprep.subr.bf16.mxu0 0
        %313 = vmatpush2.bf16.msra.mxu0 0
        %314 = vmatprep.subr.bf16.mxu0 0
        %315 = vmatpush2.bf16.msra.mxu0 0
        %316 = vmatprep.subr.bf16.mxu0 0
        %317 = vmatpush2.bf16.msra.mxu0 0
        %318 = vmatprep.subr.bf16.mxu0 0
        %319 = vmatpush2.bf16.msra.mxu0 0
        %320 = vmatprep.subr.bf16.mxu0 0
        %321 = vmatpush2.bf16.msra.mxu0 0
        %322 = vmatprep.subr.bf16.mxu0 0
        %323 = vmatpush2.bf16.msra.mxu0 0
        %324 = vmatprep.mubr.bf16.mxu0 0
        %325 = vmatmul.mubr.bf16.gmra.mxu0 %v249
        %v326 = vpop.f32.mrf.mxu0
        %v327 = vadd.f32 %v205, %v326
        %v328 = vpop.f32.mrf.mxu0
        %v329 = vadd.f32 %v205, %v328
        %v330 = vpop.f32.mrf.mxu0
        %v331 = vpop.f32.mrf.mxu0
        %332 = vdwg.mxu0
        %333 = vmatprep.subr.bf16.mxu0 0
        %334 = vmatpush1.bf16.msra.mxu0 0
        %335 = vmatprep.subr.bf16.mxu0 0
        %336 = vmatpush1.bf16.msra.mxu0 0
        %337 = vmatprep.subr.bf16.mxu0 0
        %338 = vmatpush1.bf16.msra.mxu0 0
        %339 = vmatprep.subr.bf16.mxu0 0
        %340 = vmatpush1.bf16.msra.mxu0 0
        %341 = vmatprep.subr.bf16.mxu0 0
        %342 = vmatpush1.bf16.msra.mxu0 0
        %343 = vmatprep.subr.bf16.mxu0 0
        %344 = vmatpush1.bf16.msra.mxu0 0
        %345 = vmatprep.subr.bf16.mxu0 0
        %346 = vmatpush1.bf16.msra.mxu0 0
        %347 = vmatprep.subr.bf16.mxu0 %v236
        %348 = vmatpush1.bf16.msra.mxu0 %v235
        %349 = vmatprep.subr.bf16.mxu0 0
        %350 = vmatpush2.bf16.msra.mxu0 0
        %351 = vmatprep.subr.bf16.mxu0 0
        %352 = vmatpush2.bf16.msra.mxu0 0
        %353 = vmatprep.subr.bf16.mxu0 0
        %354 = vmatpush2.bf16.msra.mxu0 0
        %355 = vmatprep.subr.bf16.mxu0 0
        %356 = vmatpush2.bf16.msra.mxu0 0
        %357 = vmatprep.subr.bf16.mxu0 0
        %358 = vmatpush2.bf16.msra.mxu0 0
        %359 = vmatprep.subr.bf16.mxu0 0
        %360 = vmatpush2.bf16.msra.mxu0 0
        %361 = vmatprep.subr.bf16.mxu0 0
        %362 = vmatpush2.bf16.msra.mxu0 0
        %363 = vmatprep.subr.bf16.mxu0 0
        %364 = vmatpush2.bf16.msra.mxu0 0
        %365 = vmatprep.mubr.bf16.mxu0 0
        %366 = vmatmul.mubr.bf16.gmra.mxu0 %v249
        %v367 = vpop.f32.mrf.mxu0
        %v368 = vadd.f32 %v205, %v367
        %v369 = vpop.f32.mrf.mxu0
        %v370 = vadd.f32 %v205, %v369
        %v371 = vpop.f32.mrf.mxu0
        %v372 = vpop.f32.mrf.mxu0
        %373 = vdwg.mxu0
        %374 = vmatprep.subr.bf16.mxu0 0
        %375 = vmatpush1.bf16.msra.mxu0 0
        %376 = vmatprep.subr.bf16.mxu0 0
        %377 = vmatpush1.bf16.msra.mxu0 0
        %378 = vmatprep.subr.bf16.mxu0 0
        %379 = vmatpush1.bf16.msra.mxu0 0
        %380 = vmatprep.subr.bf16.mxu0 0
        %381 = vmatpush1.bf16.msra.mxu0 0
        %382 = vmatprep.subr.bf16.mxu0 0
        %383 = vmatpush1.bf16.msra.mxu0 0
        %384 = vmatprep.subr.bf16.mxu0 0
        %385 = vmatpush1.bf16.msra.mxu0 0
        %386 = vmatprep.subr.bf16.mxu0 0
        %387 = vmatpush1.bf16.msra.mxu0 0
        %388 = vmatprep.subr.bf16.mxu0 %v238
        %389 = vmatpush1.bf16.msra.mxu0 %v237
        %390 = vmatprep.subr.bf16.mxu0 0
        %391 = vmatpush2.bf16.msra.mxu0 0
        %392 = vmatprep.subr.bf16.mxu0 0
        %393 = vmatpush2.bf16.msra.mxu0 0
        %394 = vmatprep.subr.bf16.mxu0 0
        %395 = vmatpush2.bf16.msra.mxu0 0
        %396 = vmatprep.subr.bf16.mxu0 0
        %397 = vmatpush2.bf16.msra.mxu0 0
        %398 = vmatprep.subr.bf16.mxu0 0
        %399 = vmatpush2.bf16.msra.mxu0 0
        %400 = vmatprep.subr.bf16.mxu0 0
        %401 = vmatpush2.bf16.msra.mxu0 0
        %402 = vmatprep.subr.bf16.mxu0 0
        %403 = vmatpush2.bf16.msra.mxu0 0
        %404 = vmatprep.subr.bf16.mxu0 0
        %405 = vmatpush2.bf16.msra.mxu0 0
        %406 = vmatprep.mubr.bf16.mxu0 0
        %407 = vmatmul.mubr.bf16.gmra.mxu0 %v249
        %v408 = vpop.f32.mrf.mxu0
        %v409 = vadd.f32 %v205, %v408
        %v410 = vpop.f32.mrf.mxu0
        %v411 = vadd.f32 %v205, %v410
        %v412 = vpop.f32.mrf.mxu0
        %v413 = vpop.f32.mrf.mxu0
        %414 = vdwg.mxu0
        %vm415 = vcmp.gt.f32.partialorder %v286, 0.0
        %vm416 = vcmp.gt.f32.partialorder %v288, 0.0
        %vm417 = vcmp.gt.f32.partialorder %v327, 0.0
        %vm418 = vcmp.gt.f32.partialorder %v329, 0.0
        %vm419 = vcmp.gt.f32.partialorder %v368, 0.0
        %vm420 = vcmp.gt.f32.partialorder %v370, 0.0
        %vm421 = vcmp.gt.f32.partialorder %v409, 0.0
        %vm422 = vcmp.gt.f32.partialorder %v411, 0.0
        %v423 = vmul.f32 %v286, 0.2
        %v424 = vmul.f32 %v288, 0.2
        %v425 = vmul.f32 %v327, 0.2
        %v426 = vmul.f32 %v329, 0.2
        %v427 = vmul.f32 %v368, 0.2
        %v428 = vmul.f32 %v370, 0.2
        %v429 = vmul.f32 %v409, 0.2
        %v430 = vmul.f32 %v411, 0.2
        %v431 = vsel %vm415, %v286, %v423
        %v432 = vsel %vm416, %v288, %v424
        %v433 = vsel %vm417, %v327, %v425
        %v434 = vsel %vm418, %v329, %v426
        %v435 = vsel %vm419, %v368, %v427
        %v436 = vsel %vm420, %v370, %v428
        %v437 = vsel %vm421, %v409, %v429
        %v438 = vsel %vm422, %v411, %v430
        %v439 = vpack.c.bf16 %v431, %v431
        %v440 = vpack.c.bf16 %v432, %v432
        %v441 = vpack.c.bf16 %v433, %v433
        %v442 = vpack.c.bf16 %v434, %v434
        %v443 = vpack.c.bf16 %v435, %v435
        %v444 = vpack.c.bf16 %v436, %v436
        %v445 = vpack.c.bf16 %v437, %v437
        %v446 = vpack.c.bf16 %v438, %v438
        %v455 = vunpack.c.l.b16 %v439
        %v456 = vunpack.c.l.b16 %v440
        %v457 = vunpack.c.l.b16 %v441
        %v458 = vunpack.c.l.b16 %v442
        %v459 = vunpack.c.l.b16 %v443
        %v460 = vunpack.c.l.b16 %v444
        %v461 = vunpack.c.l.b16 %v445
        %v462 = vunpack.c.l.b16 %v446
        %v463 = vpack.c.b16 %v456, %v455
        %v464 = vpack.c.b16 %v458, %v457
        %v465 = vpack.c.b16 %v460, %v459
        %v466 = vpack.c.b16 %v462, %v461
        %471 = vst [vmem:[%s188] sm:$0xff] %v463
        %472 = vst [vmem:[%s188 + $0x8] sm:$0xff] %v464
        %473 = vst [vmem:[%s188 + $0x10] sm:$0xff] %v465
        %474 = vst [vmem:[%s188 + $0x18] sm:$0xff] %v466
        %s475 = sand.u32 %s96, 1
        %s476 = scalar_lea.sflag [#allocation4], %s475
        %s477 = sand.u32 %s96, 1
        %s478 = smul.addr %s477, 32
        %s479 = scalar_lea.vmem [#allocation5], %s478
        // Predicated region
        $region37: #{tpu_custom_call.1} parent=31 // pred_check
          %p480 = pneg %p106
        $region38: #{tpu_custom_call.1} parent=31 // pred_check_branch
          %482 = sbr.rel (%p480) target = $region40
        $region39: #{tpu_custom_call.1} parent=31 // pred_region
          %s483 = smul.u32 8, %s20
          %s485 = ssub.s32 512, 512
          %486 = vsyncadd %s476, %s485
          %s487 = smul.addr %s483, 64
          %s488 = scalar_lea.hbm %s3, %s487
          %s490 = sshll.u32 %s479, 4
          %s491 = int_to_ptr.vmem [resolvable:$true] %s490
          %493 = dma.vmem_to_hbm [thread:$0]  %s491, 512, %s488, %s476
        $region40: #{tpu_custom_call.1} parent=31 // pred_fallthru
          _
      $region32: #{tpu_custom_call.1} parent=5 // pred_fallthru
        _
      %p494 = scmp.le.s32.totalorder 2, %s15
      // Predicated region
      $region41: #{tpu_custom_call.1} parent=5 // pred_check
        %p495 = pneg %p494
      $region42: #{tpu_custom_call.1} parent=5 // pred_check_branch
        %497 = sbr.rel (%p495) target = $region44
      $region43: #{tpu_custom_call.1} parent=5 // pred_region
        %s498 = ssub.s32 %s15, 2
        // Predicated region
        $region45: #{tpu_custom_call.1} parent=43 // pred_check
          %p499 = pneg %p112
        $region46: #{tpu_custom_call.1} parent=43 // pred_check_branch
          %501 = sbr.rel (%p499) target = $region48
        $region47: #{tpu_custom_call.1} parent=43 // pred_region
          %s502 = sand.u32 %s97, 1
          %s503 = scalar_lea.sflag [#allocation4], %s502
          %s504 = sand.u32 %s97, 1
          %s505 = smul.addr %s504, 32
          %s506 = scalar_lea.vmem [#allocation5], %s505
          %507 = dma.done %s503, 512
        $region48: #{tpu_custom_call.1} parent=43 // pred_fallthru
          _
      $region44: #{tpu_custom_call.1} parent=5 // pred_fallthru
        _
    $region6: #{tpu_custom_call.1} parent=1 // loop_footer
      %s19 = sadd.s32 1, %s15
    $region7: #{tpu_custom_call.1} parent=1 // loop_footer_branch
      %14 = sbr.rel target = $region3
    $region8: #{tpu_custom_call.1} parent=1 // loop_exit
      _
    %508 = vsyncpa [#allocation3], 1
    %s509 = scalar_lea.sflag [#allocation3], 1
    %510 = vsyncpa %s509, 1
    %511 = vsyncpa [#allocation4], 1
    %s512 = scalar_lea.sflag [#allocation4], 1
    %513 = vsyncpa %s512, 1

</llo_original>
